<compile_context>
chip_gen: v7x
topology: tpu7x:2x2x1
jax: 0.10.0
libtpu: 0.0.40
codegen_flags: <defaults>
</compile_context>

<pallas_src>
import functools

import numpy as np
import jax
import jax.numpy as jnp
from jax import lax
from jax.experimental import pallas as pl
from jax.experimental.pallas import tpu as pltpu


# --------------------------------------------------------------------------- #
# WarmStartGradientReverseLayer (the spec module): forward is identity.
# --------------------------------------------------------------------------- #
def warm_start_grl_coeff(alpha=1.0, lo=0.0, hi=1.0, iter_num=0, max_iters=1000.0):
    """coeff = 2*(hi-lo)/(1+exp(-alpha*iter/max_iters)) - (hi-lo) + lo (backward-only)."""
    return float(2.0 * (hi - lo) / (1.0 + np.exp(-alpha * iter_num / max_iters))
                 - (hi - lo) + lo)


def warm_start_grl_forward(x, alpha=1.0, lo=0.0, hi=1.0, iter_num=0, max_iters=1000.0):
    """Forward of WarmStartGradientReverseLayer: identity (GradientReverseFunction
    forward is input * 1.0). The coeff is returned for a (future) custom_vjp backward."""
    return x, warm_start_grl_coeff(alpha, lo, hi, iter_num, max_iters)


# --------------------------------------------------------------------------- #
# Kernel
# --------------------------------------------------------------------------- #
def _softmax_rows(x):
    m = jnp.max(x, axis=1, keepdims=True)
    e = jnp.exp(x - m)
    return e / jnp.sum(e, axis=1, keepdims=True)


def _cdan_kernel(entropy_conditioning, B_s, B_t, Fd, tile_k,
                 g_s_ref, g_t_ref, f_s_ref, f_t_ref,
                 w1_ref, b1_ref, w2_ref, b2_ref,
                 loss_ref,
                 p_ref, f_ref, h_ref, acc_ref):
    k = pl.program_id(0)
    nk = pl.num_programs(0)
    B = B_s + B_t
    cpb = tile_k // Fd                       # whole classes covered per K-block (static)

    # ---- prologue (first K-step): cache softmax p and combined features once ----
    @pl.when(k == 0)
    def _prologue():
        p_ref[:B_s, :] = _softmax_rows(g_s_ref[...].astype(jnp.float32))
        p_ref[B_s:, :] = _softmax_rows(g_t_ref[...].astype(jnp.float32))
        # GRL forward is identity: features enter the discriminator unchanged.
        f_ref[:B_s, :] = f_s_ref[...].astype(jnp.float32)
        f_ref[B_s:, :] = f_t_ref[...].astype(jnp.float32)

    # ---- every K-step: build only this (B, tile_k) h-block, one fused MXU dot ----
    p = p_ref[...]                                              # (B, C) f32
    f = f_ref[...]                                              # (B, Fd) f32
    col_ids = lax.broadcasted_iota(jnp.int32, p.shape, 1)
    for j in range(cpb):                                        # static unroll
        c = k * cpb + j                                         # dynamic class index
        # one-hot column select (avoids dynamic lane slicing; C is tiny)
        p_col = jnp.sum(jnp.where(col_ids == c, p, 0.0), axis=1, keepdims=True)
        h_ref[:, j * Fd:(j + 1) * Fd] = (p_col * f).astype(jnp.bfloat16)

    prod = jnp.dot(h_ref[...], w1_ref[...],                     # (B, H) f32
                   preferred_element_type=jnp.float32)

    @pl.when(k == 0)
    def _init():
        acc_ref[...] = prod

    @pl.when(k > 0)
    def _accum():
        acc_ref[...] += prod

    # ---- epilogue (last K-step): bias + ReLU + Linear(H->1) + BCE-with-logits ----
    @pl.when(k == nk - 1)
    def _epilogue():
        b1 = b1_ref[...]                                        # (1, H) f32
        w2 = w2_ref[...]                                        # (1, H) f32
        b2 = b2_ref[0, 0]                                       # scalar from SMEM

        a1 = jnp.maximum(acc_ref[...] + b1, 0.0)                # ReLU
        # N=1 output: VPU multiply + XLU lane reduce (no 1-column MXU matmul).
        z = jnp.sum(a1 * w2, axis=1, keepdims=True) + b2        # (B, 1) logits

        # Stable BCE with logits: softplus(z) - label*z (label 1 = source, 0 = target).
        # TODO(synk): differs from torch's sigmoid + log clamped at -100 only for |z|>~100.
        sp = jnp.maximum(z, 0.0) + jnp.log1p(jnp.exp(-jnp.abs(z)))
        bce_s = sp[:B_s] - z[:B_s]                              # -log(sigmoid(z))
        bce_t = sp[B_s:]                                        # -log(1 - sigmoid(z))

        if entropy_conditioning:                                # statically guarded
            p_all = p_ref[...]                                  # reuse cached softmax
            ent = -jnp.sum(p_all * jnp.log(p_all + 1e-5), axis=1, keepdims=True)
            w = 1.0 + jnp.exp(-ent)                             # (B, 1)
            scale = B / jnp.sum(w)
            bce_s = bce_s * (w[:B_s] * scale)
            bce_t = bce_t * (w[B_s:] * scale)

        loss_ref[0, 0] = (jnp.sum(bce_s) + jnp.sum(bce_t)) / B


# --------------------------------------------------------------------------- #
# Wrapper
# --------------------------------------------------------------------------- #
def _pick_tile_k(C, Fd, H, budget_bytes=8 << 20):
    """Largest K-tile (whole classes) whose double-buffered bf16 w1 block fits budget."""
    best_m = 1
    for m in range(1, C + 1):
        if C % m == 0 and 2 * (m * Fd) * H * 2 <= budget_bytes:
            best_m = m
    return best_m * Fd


def cdan_loss(g_s, f_s, g_t, f_t, w1_2d, b1, w2, b2,
              entropy_conditioning=False, tile_k=None):
    """Forward of ConditionalDomainAdversarialLoss (sigmoid=True, reduction='mean').

    w1_2d: discriminator first-layer weights, shape (C*Fd, H), ideally stored bf16.
    """
    B_s, C = g_s.shape
    B_t = g_t.shape[0]
    Fd = f_s.shape[1]
    K, H = w1_2d.shape
    B = B_s + B_t
    assert K == C * Fd, "w1 must be the row-major flatten of (C*Fd, H)"
    assert Fd % 128 == 0, "feature dim must be lane-aligned (multiple of 128)"
    assert H % 128 == 0, "discriminator hidden dim must be a multiple of 128"

    w1_2d = w1_2d.astype(jnp.bfloat16)          # no-op if already stored bf16

    if tile_k is None:
        tile_k = _pick_tile_k(C, Fd, H)         # == K at demo shapes -> single grid step
    assert K % tile_k == 0 and tile_k % Fd == 0 and tile_k % 128 == 0
    nk = K // tile_k

    kernel = functools.partial(_cdan_kernel, entropy_conditioning, B_s, B_t, Fd, tile_k)

    grid_spec = pltpu.PrefetchScalarGridSpec(
        num_scalar_prefetch=0,
        grid=(nk,),
        in_specs=[
            pl.BlockSpec((B_s, C), lambda k: (0, 0)),            # g_s (resident)
            pl.BlockSpec((B_t, C), lambda k: (0, 0)),            # g_t
            pl.BlockSpec((B_s, Fd), lambda k: (0, 0)),           # f_s
            pl.BlockSpec((B_t, Fd), lambda k: (0, 0)),           # f_t
            pl.BlockSpec((tile_k, H), lambda k: (k, 0)),         # w1: streamed K-blocks
            pl.BlockSpec((1, H), lambda k: (0, 0)),              # b1
            pl.BlockSpec((1, H), lambda k: (0, 0)),              # w2
            pl.BlockSpec(memory_space=pltpu.MemorySpace.SMEM),   # b2 scalar
        ],
        out_specs=pl.BlockSpec(memory_space=pltpu.MemorySpace.SMEM),   # (1,1) loss
        scratch_shapes=[
            pltpu.VMEM((B, C), jnp.float32),                     # cached softmax p
            pltpu.VMEM((B, Fd), jnp.float32),                    # combined features
            pltpu.VMEM((B, tile_k), jnp.bfloat16),               # per-step h block
            pltpu.VMEM((B, H), jnp.float32),                     # fused accumulator
        ],
    )

    # VMEM budget = actual footprint + headroom, capped v7x-safe (<= 48 MiB).
    footprint = (2 * tile_k * H * 2                              # w1 block, double-buffered
                 + 2 * (B * C + B * Fd) * 4                      # g/f inputs
                 + 2 * 2 * H * 4                                 # b1, w2
                 + B * C * 4 + B * Fd * 4 + B * tile_k * 2 + B * H * 4)   # scratches
    vmem_limit = int(min(48 << 20, max(16 << 20, 2 * footprint + (2 << 20))))

    return pl.pallas_call(
        kernel,
        out_shape=jax.ShapeDtypeStruct((1, 1), jnp.float32),
        grid_spec=grid_spec,
        compiler_params=pltpu.CompilerParams(
            dimension_semantics=("arbitrary",),                  # K is a reduction axis
            vmem_limit_bytes=vmem_limit),
    )(g_s, g_t, f_s, f_t, w1_2d, b1, w2, b2)


# --------------------------------------------------------------------------- #
# Pure-JAX references for validation
# --------------------------------------------------------------------------- #
def cdan_loss_reference(g_s, f_s, g_t, f_t, w1, b1, w2, b2,
                        entropy_conditioning=False):
    """Faithful f32 replica of the PyTorch forward (sigmoid + clamped-log BCE)."""
    g = jnp.concatenate([g_s, g_t], axis=0)
    f = jnp.concatenate([f_s, f_t], axis=0)
    B, C = g.shape
    Fd = f.shape[1]
    p = jax.nn.softmax(g, axis=1)
    h = (p[:, :, None] * f[:, None, :]).reshape(B, C * Fd)
    z1 = h @ w1.reshape(C * Fd, -1) + b1
    a1 = jnp.maximum(z1, 0.0)
    z2 = a1 @ w2.T + b2
    d = jax.nn.sigmoid(z2)
    label = jnp.concatenate([jnp.ones((g_s.shape[0], 1), jnp.float32),
                             jnp.zeros((g_t.shape[0], 1), jnp.float32)], axis=0)
    log_d = jnp.maximum(jnp.log(d), -100.0)
    log_1md = jnp.maximum(jnp.log(1.0 - d), -100.0)
    bce = -(label * log_d + (1.0 - label) * log_1md)
    if entropy_conditioning:
        ent = -jnp.sum(p * jnp.log(p + 1e-5), axis=1, keepdims=True)
        w = 1.0 + jnp.exp(-ent)
        w = w / jnp.sum(w) * B
        bce = bce * w
    return jnp.mean(bce)


def cdan_loss_reference_bf16(g_s, f_s, g_t, f_t, w1_2d_bf16, b1, w2, b2,
                             entropy_conditioning=False):
    """Replica of the kernel's exact numerics (bf16 MXU operands, f32 accumulate)."""
    g = jnp.concatenate([g_s, g_t], axis=0)
    f = jnp.concatenate([f_s, f_t], axis=0)
    B, C = g.shape
    Fd = f.shape[1]
    p = jax.nn.softmax(g, axis=1)
    h = (p[:, :, None] * f[:, None, :]).reshape(B, C * Fd).astype(jnp.bfloat16)
    z1 = jnp.dot(h, w1_2d_bf16.astype(jnp.bfloat16),
                 preferred_element_type=jnp.float32) + b1
    a1 = jnp.maximum(z1, 0.0)
    z2 = jnp.sum(a1 * w2, axis=1, keepdims=True) + b2
    label = jnp.concatenate([jnp.ones((g_s.shape[0], 1), jnp.float32),
                             jnp.zeros((g_t.shape[0], 1), jnp.float32)], axis=0)
    sp = jnp.maximum(z2, 0.0) + jnp.log1p(jnp.exp(-jnp.abs(z2)))
    bce = sp - label * z2
    if entropy_conditioning:
        ent = -jnp.sum(p * jnp.log(p + 1e-5), axis=1, keepdims=True)
        w = 1.0 + jnp.exp(-ent)
        w = w / jnp.sum(w) * B
        bce = bce * w
    return jnp.mean(bce)


# --------------------------------------------------------------------------- #
# Demo / self-test
# --------------------------------------------------------------------------- #
if __name__ == "__main__":
    B_s, B_t = 4, 4          # source / target batch
    C = 8                    # num_classes  (g_* last dim)
    Fd = 128                 # features_dim (f_* last dim)
    H = 128                  # discriminator hidden dim

    key = jax.random.PRNGKey(0)
    kgs, kgt, kfs, kft, kw1, kb1, kw2, kb2 = jax.random.split(key, 8)

    g_s = jax.random.normal(kgs, (B_s, C), jnp.float32)
    g_t = jax.random.normal(kgt, (B_t, C), jnp.float32)
    f_s = jax.random.normal(kfs, (B_s, Fd), jnp.float32)
    f_t = jax.random.normal(kft, (B_t, Fd), jnp.float32)

    # deterministic synthetic discriminator parameters
    w1 = jax.random.normal(kw1, (C, Fd, H), jnp.float32) * 0.02
    b1 = jax.random.normal(kb1, (1, H), jnp.float32) * 0.01
    w2 = jax.random.normal(kw2, (1, H), jnp.float32) * 0.05
    b2 = jax.random.normal(kb2, (1, 1), jnp.float32) * 0.01

    # WarmStartGradientReverseLayer forward: identity (coeff only affects backward).
    f_s_grl, coeff = warm_start_grl_forward(f_s, alpha=1.0, lo=0.0, hi=1.0,
                                            iter_num=0, max_iters=1000.0)
    f_t_grl, _ = warm_start_grl_forward(f_t, alpha=1.0, lo=0.0, hi=1.0,
                                        iter_num=0, max_iters=1000.0)

    # Store first-layer weights in the layout/dtype the kernel streams (bf16, 2-D).
    w1_k = w1.reshape(C * Fd, H).astype(jnp.bfloat16)

    for cond in (False, True):
        loss = jax.block_until_ready(
            cdan_loss(g_s, f_s_grl, g_t, f_t_grl, w1_k, b1, w2, b2,
                      entropy_conditioning=cond))
        loss_val = float(np.asarray(loss)[0, 0])

        ref_bf16 = float(jax.block_until_ready(
            cdan_loss_reference_bf16(g_s, f_s, g_t, f_t, w1_k, b1, w2, b2,
                                     entropy_conditioning=cond)))
        ref_f32 = float(jax.block_until_ready(
            cdan_loss_reference(g_s, f_s, g_t, f_t, w1, b1, w2, b2,
                                entropy_conditioning=cond)))

        # Tight check against the bf16-matmul reference (same numerics as the kernel).
        np.testing.assert_allclose(loss_val, ref_bf16, rtol=1e-4, atol=1e-4)
        # Looser check against the full-f32 torch-replica (bf16 quantization slack).
        np.testing.assert_allclose(loss_val, ref_f32, rtol=5e-3, atol=5e-3)

    print("KERNEL_OK")
</pallas_src>

<mosaic_0001>
module attributes {stable_mosaic.version = 11 : i64} {
  func.func @_cdan_kernel(%arg0: i32, %arg1: memref<4x8xf32, #tpu.memory_space<vmem>>, %arg2: memref<4x8xf32, #tpu.memory_space<vmem>>, %arg3: memref<4x128xf32, #tpu.memory_space<vmem>>, %arg4: memref<4x128xf32, #tpu.memory_space<vmem>>, %arg5: memref<1024x128xbf16, #tpu.memory_space<vmem>>, %arg6: memref<1x128xf32, #tpu.memory_space<vmem>>, %arg7: memref<1x128xf32, #tpu.memory_space<vmem>>, %arg8: memref<1x1xf32, #tpu.memory_space<smem>>, %arg9: memref<1x1xf32, #tpu.memory_space<smem>>, %arg10: memref<8x8xf32, #tpu.memory_space<vmem>>, %arg11: memref<8x128xf32, #tpu.memory_space<vmem>>, %arg12: memref<8x1024xbf16, #tpu.memory_space<vmem>>, %arg13: memref<8x128xf32, #tpu.memory_space<vmem>>) attributes {dimension_semantics = [#tpu.dimension_semantics<arbitrary>], iteration_bounds = array<i64: 1>, scalar_prefetch = 0 : i64, scratch_operands = 4 : i64, tpu.core_type = #tpu.core_type<tc>, window_params = [{pipeline_mode = #tpu.pipeline_mode<synchronous>, transform_indices = @transform_0, window_bounds = array<i64: 4, 8>}, {pipeline_mode = #tpu.pipeline_mode<synchronous>, transform_indices = @transform_1, window_bounds = array<i64: 4, 8>}, {pipeline_mode = #tpu.pipeline_mode<synchronous>, transform_indices = @transform_2, window_bounds = array<i64: 4, 128>}, {pipeline_mode = #tpu.pipeline_mode<synchronous>, transform_indices = @transform_3, window_bounds = array<i64: 4, 128>}, {transform_indices = @transform_4, window_bounds = array<i64: 1024, 128>}, {pipeline_mode = #tpu.pipeline_mode<synchronous>, transform_indices = @transform_5, window_bounds = array<i64: 1, 128>}, {pipeline_mode = #tpu.pipeline_mode<synchronous>, transform_indices = @transform_6, window_bounds = array<i64: 1, 128>}, {transform_indices = @transform_7, window_bounds = array<i64: 1, 1>}, {transform_indices = @transform_8, window_bounds = array<i64: 1, 1>}]} {
    %c0_i32 = arith.constant 0 : i32
    %0 = arith.cmpi eq, %arg0, %c0_i32 : i32
    %1 = arith.extui %0 : i1 to i32
    %c0_i32_0 = arith.constant 0 : i32
    %2 = arith.cmpi ne, %1, %c0_i32_0 : i32
    scf.if %2 {
      %c0_47 = arith.constant 0 : index
      %c0_48 = arith.constant 0 : index
      %114 = vector.load %arg1[%c0_47, %c0_48] : memref<4x8xf32, #tpu.memory_space<vmem>>, vector<4x8xf32>
      %cst_49 = arith.constant dense<0xFF800000> : vector<4xf32>
      %115 = vector.multi_reduction <maximumf>, %114, %cst_49 [1] : vector<4x8xf32> to vector<4xf32>
      %116 = vector.shape_cast %115 : vector<4xf32> to vector<4x1xf32>
      %117 = vector.broadcast %116 : vector<4x1xf32> to vector<4x8xf32>
      %118 = arith.subf %114, %117 : vector<4x8xf32>
      %119 = math.exp %118 : vector<4x8xf32>
      %cst_50 = arith.constant dense<0.000000e+00> : vector<4xf32>
      %120 = vector.multi_reduction <add>, %119, %cst_50 [1] : vector<4x8xf32> to vector<4xf32>
      %121 = vector.shape_cast %120 : vector<4xf32> to vector<4x1xf32>
      %122 = vector.broadcast %121 : vector<4x1xf32> to vector<4x8xf32>
      %123 = arith.divf %119, %122 : vector<4x8xf32>
      %c0_51 = arith.constant 0 : index
      %c0_52 = arith.constant 0 : index
      %124 = vector.load %arg10[%c0_51, %c0_52] : memref<8x8xf32, #tpu.memory_space<vmem>>, vector<4x8xf32>
      tpu.vector_store %arg10[%c0_51, %c0_52], %123 {strides = array<i32>} : memref<8x8xf32, #tpu.memory_space<vmem>>, vector<4x8xf32>,
      %c0_53 = arith.constant 0 : index
      %c0_54 = arith.constant 0 : index
      %125 = vector.load %arg2[%c0_53, %c0_54] : memref<4x8xf32, #tpu.memory_space<vmem>>, vector<4x8xf32>
      %cst_55 = arith.constant dense<0xFF800000> : vector<4xf32>
      %126 = vector.multi_reduction <maximumf>, %125, %cst_55 [1] : vector<4x8xf32> to vector<4xf32>
      %127 = vector.shape_cast %126 : vector<4xf32> to vector<4x1xf32>
      %128 = vector.broadcast %127 : vector<4x1xf32> to vector<4x8xf32>
      %129 = arith.subf %125, %128 : vector<4x8xf32>
      %130 = math.exp %129 : vector<4x8xf32>
      %cst_56 = arith.constant dense<0.000000e+00> : vector<4xf32>
      %131 = vector.multi_reduction <add>, %130, %cst_56 [1] : vector<4x8xf32> to vector<4xf32>
      %132 = vector.shape_cast %131 : vector<4xf32> to vector<4x1xf32>
      %133 = vector.broadcast %132 : vector<4x1xf32> to vector<4x8xf32>
      %134 = arith.divf %130, %133 : vector<4x8xf32>
      %c4 = arith.constant 4 : index
      %c0_57 = arith.constant 0 : index
      %135 = vector.load %arg10[%c4, %c0_57] : memref<8x8xf32, #tpu.memory_space<vmem>>, vector<4x8xf32>
      tpu.vector_store %arg10[%c4, %c0_57], %134 {strides = array<i32>} : memref<8x8xf32, #tpu.memory_space<vmem>>, vector<4x8xf32>,
      %c0_58 = arith.constant 0 : index
      %c0_59 = arith.constant 0 : index
      %136 = vector.load %arg3[%c0_58, %c0_59] : memref<4x128xf32, #tpu.memory_space<vmem>>, vector<4x128xf32>
      %c0_60 = arith.constant 0 : index
      %c0_61 = arith.constant 0 : index
      %137 = vector.load %arg11[%c0_60, %c0_61] : memref<8x128xf32, #tpu.memory_space<vmem>>, vector<4x128xf32>
      tpu.vector_store %arg11[%c0_60, %c0_61], %136 {strides = array<i32>} : memref<8x128xf32, #tpu.memory_space<vmem>>, vector<4x128xf32>,
      %c0_62 = arith.constant 0 : index
      %c0_63 = arith.constant 0 : index
      %138 = vector.load %arg4[%c0_62, %c0_63] : memref<4x128xf32, #tpu.memory_space<vmem>>, vector<4x128xf32>
      %c4_64 = arith.constant 4 : index
      %c0_65 = arith.constant 0 : index
      %139 = vector.load %arg11[%c4_64, %c0_65] : memref<8x128xf32, #tpu.memory_space<vmem>>, vector<4x128xf32>
      tpu.vector_store %arg11[%c4_64, %c0_65], %138 {strides = array<i32>} : memref<8x128xf32, #tpu.memory_space<vmem>>, vector<4x128xf32>,
    } else {
    }
    %c0 = arith.constant 0 : index
    %c0_1 = arith.constant 0 : index
    %3 = vector.load %arg10[%c0, %c0_1] : memref<8x8xf32, #tpu.memory_space<vmem>>, vector<8x8xf32>
    %c0_2 = arith.constant 0 : index
    %c0_3 = arith.constant 0 : index
    %4 = vector.load %arg11[%c0_2, %c0_3] : memref<8x128xf32, #tpu.memory_space<vmem>>, vector<8x128xf32>
    %5 = tpu.iota {dimensions = array<i32: 1>} : vector<8x8xi32>
    %c8_i32 = arith.constant 8 : i32
    %6 = arith.muli %arg0, %c8_i32 : i32
    %c0_i32_4 = arith.constant 0 : i32
    %7 = arith.addi %6, %c0_i32_4 : i32
    %8 = vector.broadcast %7 : i32 to vector<8x8xi32>
    %9 = arith.cmpi eq, %5, %8 : vector<8x8xi32>
    %cst = arith.constant 0.000000e+00 : f32
    %10 = vector.broadcast %cst : f32 to vector<8x8xf32>
    %11 = arith.select %9, %3, %10 : vector<8x8xi1>, vector<8x8xf32>
    %cst_5 = arith.constant dense<0.000000e+00> : vector<8xf32>
    %12 = vector.multi_reduction <add>, %11, %cst_5 [1] : vector<8x8xf32> to vector<8xf32>
    %13 = vector.shape_cast %12 : vector<8xf32> to vector<8x1xf32>
    %14 = vector.broadcast %13 : vector<8x1xf32> to vector<8x128xf32>
    %15 = arith.mulf %14, %4 : vector<8x128xf32>
    %16 = arith.truncf %15 : vector<8x128xf32> to vector<8x128xbf16>
    %c0_6 = arith.constant 0 : index
    %c0_7 = arith.constant 0 : index
    %17 = vector.load %arg12[%c0_6, %c0_7] : memref<8x1024xbf16, #tpu.memory_space<vmem>>, vector<8x128xbf16>
    tpu.vector_store %arg12[%c0_6, %c0_7], %16 {strides = array<i32>} : memref<8x1024xbf16, #tpu.memory_space<vmem>>, vector<8x128xbf16>,
    %c8_i32_8 = arith.constant 8 : i32
    %18 = arith.muli %arg0, %c8_i32_8 : i32
    %c1_i32 = arith.constant 1 : i32
    %19 = arith.addi %18, %c1_i32 : i32
    %20 = vector.broadcast %19 : i32 to vector<8x8xi32>
    %21 = arith.cmpi eq, %5, %20 : vector<8x8xi32>
    %cst_9 = arith.constant 0.000000e+00 : f32
    %22 = vector.broadcast %cst_9 : f32 to vector<8x8xf32>
    %23 = arith.select %21, %3, %22 : vector<8x8xi1>, vector<8x8xf32>
    %cst_10 = arith.constant dense<0.000000e+00> : vector<8xf32>
    %24 = vector.multi_reduction <add>, %23, %cst_10 [1] : vector<8x8xf32> to vector<8xf32>
    %25 = vector.shape_cast %24 : vector<8xf32> to vector<8x1xf32>
    %26 = vector.broadcast %25 : vector<8x1xf32> to vector<8x128xf32>
    %27 = arith.mulf %26, %4 : vector<8x128xf32>
    %28 = arith.truncf %27 : vector<8x128xf32> to vector<8x128xbf16>
    %c0_11 = arith.constant 0 : index
    %c128 = arith.constant 128 : index
    %29 = vector.load %arg12[%c0_11, %c128] : memref<8x1024xbf16, #tpu.memory_space<vmem>>, vector<8x128xbf16>
    tpu.vector_store %arg12[%c0_11, %c128], %28 {strides = array<i32>} : memref<8x1024xbf16, #tpu.memory_space<vmem>>, vector<8x128xbf16>,
    %c8_i32_12 = arith.constant 8 : i32
    %30 = arith.muli %arg0, %c8_i32_12 : i32
    %c2_i32 = arith.constant 2 : i32
    %31 = arith.addi %30, %c2_i32 : i32
    %32 = vector.broadcast %31 : i32 to vector<8x8xi32>
    %33 = arith.cmpi eq, %5, %32 : vector<8x8xi32>
    %cst_13 = arith.constant 0.000000e+00 : f32
    %34 = vector.broadcast %cst_13 : f32 to vector<8x8xf32>
    %35 = arith.select %33, %3, %34 : vector<8x8xi1>, vector<8x8xf32>
    %cst_14 = arith.constant dense<0.000000e+00> : vector<8xf32>
    %36 = vector.multi_reduction <add>, %35, %cst_14 [1] : vector<8x8xf32> to vector<8xf32>
    %37 = vector.shape_cast %36 : vector<8xf32> to vector<8x1xf32>
    %38 = vector.broadcast %37 : vector<8x1xf32> to vector<8x128xf32>
    %39 = arith.mulf %38, %4 : vector<8x128xf32>
    %40 = arith.truncf %39 : vector<8x128xf32> to vector<8x128xbf16>
    %c0_15 = arith.constant 0 : index
    %c256 = arith.constant 256 : index
    %41 = vector.load %arg12[%c0_15, %c256] : memref<8x1024xbf16, #tpu.memory_space<vmem>>, vector<8x128xbf16>
    tpu.vector_store %arg12[%c0_15, %c256], %40 {strides = array<i32>} : memref<8x1024xbf16, #tpu.memory_space<vmem>>, vector<8x128xbf16>,
    %c8_i32_16 = arith.constant 8 : i32
    %42 = arith.muli %arg0, %c8_i32_16 : i32
    %c3_i32 = arith.constant 3 : i32
    %43 = arith.addi %42, %c3_i32 : i32
    %44 = vector.broadcast %43 : i32 to vector<8x8xi32>
    %45 = arith.cmpi eq, %5, %44 : vector<8x8xi32>
    %cst_17 = arith.constant 0.000000e+00 : f32
    %46 = vector.broadcast %cst_17 : f32 to vector<8x8xf32>
    %47 = arith.select %45, %3, %46 : vector<8x8xi1>, vector<8x8xf32>
    %cst_18 = arith.constant dense<0.000000e+00> : vector<8xf32>
    %48 = vector.multi_reduction <add>, %47, %cst_18 [1] : vector<8x8xf32> to vector<8xf32>
    %49 = vector.shape_cast %48 : vector<8xf32> to vector<8x1xf32>
    %50 = vector.broadcast %49 : vector<8x1xf32> to vector<8x128xf32>
    %51 = arith.mulf %50, %4 : vector<8x128xf32>
    %52 = arith.truncf %51 : vector<8x128xf32> to vector<8x128xbf16>
    %c0_19 = arith.constant 0 : index
    %c384 = arith.constant 384 : index
    %53 = vector.load %arg12[%c0_19, %c384] : memref<8x1024xbf16, #tpu.memory_space<vmem>>, vector<8x128xbf16>
    tpu.vector_store %arg12[%c0_19, %c384], %52 {strides = array<i32>} : memref<8x1024xbf16, #tpu.memory_space<vmem>>, vector<8x128xbf16>,
    %c8_i32_20 = arith.constant 8 : i32
    %54 = arith.muli %arg0, %c8_i32_20 : i32
    %c4_i32 = arith.constant 4 : i32
    %55 = arith.addi %54, %c4_i32 : i32
    %56 = vector.broadcast %55 : i32 to vector<8x8xi32>
    %57 = arith.cmpi eq, %5, %56 : vector<8x8xi32>
    %cst_21 = arith.constant 0.000000e+00 : f32
    %58 = vector.broadcast %cst_21 : f32 to vector<8x8xf32>
    %59 = arith.select %57, %3, %58 : vector<8x8xi1>, vector<8x8xf32>
    %cst_22 = arith.constant dense<0.000000e+00> : vector<8xf32>
    %60 = vector.multi_reduction <add>, %59, %cst_22 [1] : vector<8x8xf32> to vector<8xf32>
    %61 = vector.shape_cast %60 : vector<8xf32> to vector<8x1xf32>
    %62 = vector.broadcast %61 : vector<8x1xf32> to vector<8x128xf32>
    %63 = arith.mulf %62, %4 : vector<8x128xf32>
    %64 = arith.truncf %63 : vector<8x128xf32> to vector<8x128xbf16>
    %c0_23 = arith.constant 0 : index
    %c512 = arith.constant 512 : index
    %65 = vector.load %arg12[%c0_23, %c512] : memref<8x1024xbf16, #tpu.memory_space<vmem>>, vector<8x128xbf16>
    tpu.vector_store %arg12[%c0_23, %c512], %64 {strides = array<i32>} : memref<8x1024xbf16, #tpu.memory_space<vmem>>, vector<8x128xbf16>,
    %c8_i32_24 = arith.constant 8 : i32
    %66 = arith.muli %arg0, %c8_i32_24 : i32
    %c5_i32 = arith.constant 5 : i32
    %67 = arith.addi %66, %c5_i32 : i32
    %68 = vector.broadcast %67 : i32 to vector<8x8xi32>
    %69 = arith.cmpi eq, %5, %68 : vector<8x8xi32>
    %cst_25 = arith.constant 0.000000e+00 : f32
    %70 = vector.broadcast %cst_25 : f32 to vector<8x8xf32>
    %71 = arith.select %69, %3, %70 : vector<8x8xi1>, vector<8x8xf32>
    %cst_26 = arith.constant dense<0.000000e+00> : vector<8xf32>
    %72 = vector.multi_reduction <add>, %71, %cst_26 [1] : vector<8x8xf32> to vector<8xf32>
    %73 = vector.shape_cast %72 : vector<8xf32> to vector<8x1xf32>
    %74 = vector.broadcast %73 : vector<8x1xf32> to vector<8x128xf32>
    %75 = arith.mulf %74, %4 : vector<8x128xf32>
    %76 = arith.truncf %75 : vector<8x128xf32> to vector<8x128xbf16>
    %c0_27 = arith.constant 0 : index
    %c640 = arith.constant 640 : index
    %77 = vector.load %arg12[%c0_27, %c640] : memref<8x1024xbf16, #tpu.memory_space<vmem>>, vector<8x128xbf16>
    tpu.vector_store %arg12[%c0_27, %c640], %76 {strides = array<i32>} : memref<8x1024xbf16, #tpu.memory_space<vmem>>, vector<8x128xbf16>,
    %c8_i32_28 = arith.constant 8 : i32
    %78 = arith.muli %arg0, %c8_i32_28 : i32
    %c6_i32 = arith.constant 6 : i32
    %79 = arith.addi %78, %c6_i32 : i32
    %80 = vector.broadcast %79 : i32 to vector<8x8xi32>
    %81 = arith.cmpi eq, %5, %80 : vector<8x8xi32>
    %cst_29 = arith.constant 0.000000e+00 : f32
    %82 = vector.broadcast %cst_29 : f32 to vector<8x8xf32>
    %83 = arith.select %81, %3, %82 : vector<8x8xi1>, vector<8x8xf32>
    %cst_30 = arith.constant dense<0.000000e+00> : vector<8xf32>
    %84 = vector.multi_reduction <add>, %83, %cst_30 [1] : vector<8x8xf32> to vector<8xf32>
    %85 = vector.shape_cast %84 : vector<8xf32> to vector<8x1xf32>
    %86 = vector.broadcast %85 : vector<8x1xf32> to vector<8x128xf32>
    %87 = arith.mulf %86, %4 : vector<8x128xf32>
    %88 = arith.truncf %87 : vector<8x128xf32> to vector<8x128xbf16>
    %c0_31 = arith.constant 0 : index
    %c768 = arith.constant 768 : index
    %89 = vector.load %arg12[%c0_31, %c768] : memref<8x1024xbf16, #tpu.memory_space<vmem>>, vector<8x128xbf16>
    tpu.vector_store %arg12[%c0_31, %c768], %88 {strides = array<i32>} : memref<8x1024xbf16, #tpu.memory_space<vmem>>, vector<8x128xbf16>,
    %c8_i32_32 = arith.constant 8 : i32
    %90 = arith.muli %arg0, %c8_i32_32 : i32
    %c7_i32 = arith.constant 7 : i32
    %91 = arith.addi %90, %c7_i32 : i32
    %92 = vector.broadcast %91 : i32 to vector<8x8xi32>
    %93 = arith.cmpi eq, %5, %92 : vector<8x8xi32>
    %cst_33 = arith.constant 0.000000e+00 : f32
    %94 = vector.broadcast %cst_33 : f32 to vector<8x8xf32>
    %95 = arith.select %93, %3, %94 : vector<8x8xi1>, vector<8x8xf32>
    %cst_34 = arith.constant dense<0.000000e+00> : vector<8xf32>
    %96 = vector.multi_reduction <add>, %95, %cst_34 [1] : vector<8x8xf32> to vector<8xf32>
    %97 = vector.shape_cast %96 : vector<8xf32> to vector<8x1xf32>
    %98 = vector.broadcast %97 : vector<8x1xf32> to vector<8x128xf32>
    %99 = arith.mulf %98, %4 : vector<8x128xf32>
    %100 = arith.truncf %99 : vector<8x128xf32> to vector<8x128xbf16>
    %c0_35 = arith.constant 0 : index
    %c896 = arith.constant 896 : index
    %101 = vector.load %arg12[%c0_35, %c896] : memref<8x1024xbf16, #tpu.memory_space<vmem>>, vector<8x128xbf16>
    tpu.vector_store %arg12[%c0_35, %c896], %100 {strides = array<i32>} : memref<8x1024xbf16, #tpu.memory_space<vmem>>, vector<8x128xbf16>,
    %c0_36 = arith.constant 0 : index
    %c0_37 = arith.constant 0 : index
    %102 = vector.load %arg12[%c0_36, %c0_37] : memref<8x1024xbf16, #tpu.memory_space<vmem>>, vector<8x1024xbf16>
    %c0_38 = arith.constant 0 : index
    %c0_39 = arith.constant 0 : index
    %103 = vector.load %arg5[%c0_38, %c0_39] : memref<1024x128xbf16, #tpu.memory_space<vmem>>, vector<1024x128xbf16>
    %cst_40 = arith.constant dense<0.000000e+00> : vector<8x128xf32>
    %104 = tpu.matmul %102, %103, %cst_40 {dimension_numbers = #tpu.dot_dimension_numbers<[1], [0], [0], [1], [0, 0, 1, 1], [], []>} : vector<8x1024xbf16>, vector<1024x128xbf16>, vector<8x128xf32> -> vector<8x128xf32>
    %c0_i32_41 = arith.constant 0 : i32
    %105 = arith.cmpi eq, %arg0, %c0_i32_41 : i32
    %106 = arith.extui %105 : i1 to i32
    %c0_i32_42 = arith.constant 0 : i32
    %107 = arith.cmpi ne, %106, %c0_i32_42 : i32
    scf.if %107 {
      %c0_47 = arith.constant 0 : index
      %c0_48 = arith.constant 0 : index
      %114 = vector.load %arg13[%c0_47, %c0_48] : memref<8x128xf32, #tpu.memory_space<vmem>>, vector<8x128xf32>
      tpu.vector_store %arg13[%c0_47, %c0_48], %104 {strides = array<i32>} : memref<8x128xf32, #tpu.memory_space<vmem>>, vector<8x128xf32>,
    } else {
    }
    %c0_i32_43 = arith.constant 0 : i32
    %108 = arith.cmpi sgt, %arg0, %c0_i32_43 : i32
    %109 = arith.extui %108 : i1 to i32
    %c0_i32_44 = arith.constant 0 : i32
    %110 = arith.cmpi ne, %109, %c0_i32_44 : i32
    scf.if %110 {
      %c0_47 = arith.constant 0 : index
      %c0_48 = arith.constant 0 : index
      %114 = vector.load %arg13[%c0_47, %c0_48] : memref<8x128xf32, #tpu.memory_space<vmem>>, vector<8x128xf32>
      %115 = arith.addf %114, %104 : vector<8x128xf32>
      %c0_49 = arith.constant 0 : index
      %c0_50 = arith.constant 0 : index
      %116 = vector.load %arg13[%c0_49, %c0_50] : memref<8x128xf32, #tpu.memory_space<vmem>>, vector<8x128xf32>
      tpu.vector_store %arg13[%c0_49, %c0_50], %115 {strides = array<i32>} : memref<8x128xf32, #tpu.memory_space<vmem>>, vector<8x128xf32>,
    } else {
    }
    %c0_i32_45 = arith.constant 0 : i32
    %111 = arith.cmpi eq, %arg0, %c0_i32_45 : i32
    %112 = arith.extui %111 : i1 to i32
    %c0_i32_46 = arith.constant 0 : i32
    %113 = arith.cmpi ne, %112, %c0_i32_46 : i32
    scf.if %113 {
      %c0_47 = arith.constant 0 : index
      %c0_48 = arith.constant 0 : index
      %114 = vector.load %arg6[%c0_47, %c0_48] : memref<1x128xf32, #tpu.memory_space<vmem>>, vector<1x128xf32>
      %c0_49 = arith.constant 0 : index
      %c0_50 = arith.constant 0 : index
      %115 = vector.load %arg7[%c0_49, %c0_50] : memref<1x128xf32, #tpu.memory_space<vmem>>, vector<1x128xf32>
      %c0_51 = arith.constant 0 : index
      %c0_52 = arith.constant 0 : index
      %116 = memref.load %arg8[%c0_51, %c0_52] : memref<1x1xf32, #tpu.memory_space<smem>>
      %c0_53 = arith.constant 0 : index
      %c0_54 = arith.constant 0 : index
      %117 = vector.load %arg13[%c0_53, %c0_54] : memref<8x128xf32, #tpu.memory_space<vmem>>, vector<8x128xf32>
      %118 = vector.broadcast %114 : vector<1x128xf32> to vector<8x128xf32>
      %119 = arith.addf %117, %118 : vector<8x128xf32>
      %cst_55 = arith.constant 0.000000e+00 : f32
      %120 = vector.broadcast %cst_55 : f32 to vector<8x128xf32>
      %121 = arith.maximumf %119, %120 : vector<8x128xf32>
      %122 = vector.broadcast %115 : vector<1x128xf32> to vector<8x128xf32>
      %123 = arith.mulf %121, %122 : vector<8x128xf32>
      %cst_56 = arith.constant dense<0.000000e+00> : vector<8xf32>
      %124 = vector.multi_reduction <add>, %123, %cst_56 [1] : vector<8x128xf32> to vector<8xf32>
      %125 = vector.shape_cast %124 : vector<8xf32> to vector<8x1xf32>
      %126 = vector.broadcast %116 : f32 to vector<8x1xf32>
      %127 = arith.addf %125, %126 : vector<8x1xf32>
      %cst_57 = arith.constant 0.000000e+00 : f32
      %128 = vector.broadcast %cst_57 : f32 to vector<8x1xf32>
      %129 = arith.maximumf %127, %128 : vector<8x1xf32>
      %130 = math.absf %127 : vector<8x1xf32>
      %cst_58 = arith.constant 0.000000e+00 : f32
      %131 = vector.broadcast %cst_58 : f32 to vector<8x1xf32>
      %132 = arith.subf %131, %130 : vector<8x1xf32>
      %133 = math.exp %132 : vector<8x1xf32>
      %134 = math.log1p %133 : vector<8x1xf32>
      %135 = arith.addf %129, %134 : vector<8x1xf32>
      %136 = vector.extract_strided_slice %135 {offsets = [0, 0], sizes = [4, 1], strides = [1, 1]} : vector<8x1xf32> to vector<4x1xf32>
      %137 = vector.extract_strided_slice %127 {offsets = [0, 0], sizes = [4, 1], strides = [1, 1]} : vector<8x1xf32> to vector<4x1xf32>
      %138 = arith.subf %136, %137 : vector<4x1xf32>
      %139 = vector.extract_strided_slice %135 {offsets = [4, 0], sizes = [4, 1], strides = [1, 1]} : vector<8x1xf32> to vector<4x1xf32>
      %140 = vector.shape_cast %138 : vector<4x1xf32> to vector<1x4x1xf32>
      %cst_59 = arith.constant dense<0.000000e+00> : vector<1xf32>
      %141 = vector.multi_reduction <add>, %140, %cst_59 [1, 2] : vector<1x4x1xf32> to vector<1xf32>
      %142 = vector.shape_cast %141 : vector<1xf32> to vector<1x1x1xf32>
      %143 = vector.extract %142[0, 0, 0] : f32 from vector<1x1x1xf32>
      %144 = vector.shape_cast %139 : vector<4x1xf32> to vector<1x4x1xf32>
      %cst_60 = arith.constant dense<0.000000e+00> : vector<1xf32>
      %145 = vector.multi_reduction <add>, %144, %cst_60 [1, 2] : vector<1x4x1xf32> to vector<1xf32>
      %146 = vector.shape_cast %145 : vector<1xf32> to vector<1x1x1xf32>
      %147 = vector.extract %146[0, 0, 0] : f32 from vector<1x1x1xf32>
      %148 = arith.addf %143, %147 : f32
      %cst_61 = arith.constant 8.000000e+00 : f32
      %149 = arith.divf %148, %cst_61 : f32
      %c0_62 = arith.constant 0 : index
      %c0_63 = arith.constant 0 : index
      %150 = memref.load %arg9[%c0_62, %c0_63] : memref<1x1xf32, #tpu.memory_space<smem>>
      memref.store %149, %arg9[%c0_62, %c0_63] : memref<1x1xf32, #tpu.memory_space<smem>>
    } else {
    }
    return
  }
  func.func @transform_0(%arg0: i32) -> (i32, i32) {
    %c0_i32 = arith.constant 0 : i32
    %c0_i32_0 = arith.constant 0 : i32
    %c0_i32_1 = arith.constant 0 : i32
    return %c0_i32, %c0_i32_0 : i32, i32
  }
  func.func @transform_1(%arg0: i32) -> (i32, i32) {
    %c0_i32 = arith.constant 0 : i32
    %c0_i32_0 = arith.constant 0 : i32
    %c0_i32_1 = arith.constant 0 : i32
    return %c0_i32, %c0_i32_0 : i32, i32
  }
  func.func @transform_2(%arg0: i32) -> (i32, i32) {
    %c0_i32 = arith.constant 0 : i32
    %c0_i32_0 = arith.constant 0 : i32
    %c0_i32_1 = arith.constant 0 : i32
    return %c0_i32, %c0_i32_0 : i32, i32
  }
  func.func @transform_3(%arg0: i32) -> (i32, i32) {
    %c0_i32 = arith.constant 0 : i32
    %c0_i32_0 = arith.constant 0 : i32
    %c0_i32_1 = arith.constant 0 : i32
    return %c0_i32, %c0_i32_0 : i32, i32
  }
  func.func @transform_4(%arg0: i32) -> (i32, i32) {
    %c0_i32 = arith.constant 0 : i32
    %c0_i32_0 = arith.constant 0 : i32
    return %arg0, %c0_i32 : i32, i32
  }
  func.func @transform_5(%arg0: i32) -> (i32, i32) {
    %c0_i32 = arith.constant 0 : i32
    %c0_i32_0 = arith.constant 0 : i32
    %c0_i32_1 = arith.constant 0 : i32
    return %c0_i32, %c0_i32_0 : i32, i32
  }
  func.func @transform_6(%arg0: i32) -> (i32, i32) {
    %c0_i32 = arith.constant 0 : i32
    %c0_i32_0 = arith.constant 0 : i32
    %c0_i32_1 = arith.constant 0 : i32
    return %c0_i32, %c0_i32_0 : i32, i32
  }
  func.func @transform_7(%arg0: i32) -> (i32, i32) {
    %c0_i32 = arith.constant 0 : i32
    %c0_i32_0 = arith.constant 0 : i32
    %c0_i32_1 = arith.constant 0 : i32
    return %c0_i32, %c0_i32_0 : i32, i32
  }
  func.func @transform_8(%arg0: i32) -> (i32, i32) {
    %c0_i32 = arith.constant 0 : i32
    %c0_i32_0 = arith.constant 0 : i32
    %c0_i32_1 = arith.constant 0 : i32
    return %c0_i32, %c0_i32_0 : i32, i32
  }
}

</mosaic_0001>

<llo_original>
// kernel: tpu_custom_call.1
$region0: #{tpu_custom_call.1}
  #allocation0 [shape = 'u32[]', space=smem, size = 0x4, offset = 0x4, fixed_abs, tag = 'smem constant byte address 0x4 - core index']
  #allocation1 [shape = 'u32[144,128]{1,0:T(1,128)}', space=vmem, size = 0x12000, scoped, tag = 'internal scratch']
  #allocation2 [shape = 'f32[8,8]{1,0:T(8,128)}', space=vmem, size = 0x1000, scoped, tag = 'scratch operand']
  #allocation3 [shape = 'f32[8,128]{1,0:T(8,128)}', space=vmem, size = 0x1000, scoped, tag = 'scratch operand']
  #allocation4 [shape = 'bf16[8,1024]{1,0:T(8,128)(2,1)}', space=vmem, size = 0x4000, scoped, tag = 'scratch operand']
  #allocation5 [shape = 'f32[8,128]{1,0:T(8,128)}', space=vmem, size = 0x1000, scoped, tag = 'scratch operand']
  #allocation6 [shape = 'f32[1,1]{1,0:T(1,128)S(6)}', space=smem, size = 0x200, scoped, tag = 'scoped memory for tpu_custom_call.1']
  %s0 = inlined_call_operand.hbm [shape: f32[4,8], index: 0, kind: input, shape index: {}]
  %s1 = inlined_call_operand.vmem [shape: f32[4,8], index: 1, kind: input, shape index: {}]
  %s2 = inlined_call_operand.vmem [shape: f32[4,128], index: 2, kind: input, shape index: {}]
  %s3 = inlined_call_operand.vmem [shape: f32[4,128], index: 3, kind: input, shape index: {}]
  %s4 = inlined_call_operand.hbm [shape: bf16[1024,128], index: 4, kind: input, shape index: {}]
  %s5 = inlined_call_operand.vmem [shape: f32[1,128], index: 5, kind: input, shape index: {}]
  %s6 = inlined_call_operand.vmem [shape: f32[1,128], index: 6, kind: input, shape index: {}]
  %s7 = inlined_call_operand.<no memory space> [shape: f32[1,1], index: 7, kind: input, shape index: {}]
  %s8 = inlined_call_operand.hbm [shape: f32[1,1], index: 8, kind: output, shape index: {}]
  %s9 = sld [smem:[#allocation0]]
  $region66: #{tpu_custom_call.1} parent=0
    _
  %s11 = ssub.s32 1, %s9
  %s12 = scalar_select 0, %s11, %s9
  %13 = sst [smem:[#allocation6]] %s7
  $region1: #{tpu_custom_call.1} parent=0
    #allocation7 [shape = 'u8[2048]{0}', space=vmem, size = 0x800, scoped, tag = 'input window, operand 0, single buffered']
    #allocation8 [shape = 's32[1]{0}', space=sflag, size = 0x4, scoped, tag = 'scoped memory for tpu_custom_call.1']
    #allocation9 [shape = 's32[1]{0}', space=sflag, size = 0x4, scoped, tag = 'scoped memory for tpu_custom_call.1']
    #allocation10 [shape = 'u8[262144]{0}', space=vmem, size = 0x40000, scoped, tag = 'input window, operand 4, single buffered']
    #allocation11 [shape = 's32[1]{0}', space=sflag, size = 0x4, scoped, tag = 'scoped memory for tpu_custom_call.1']
    #allocation12 [shape = 'u8[512]{0}', space=smem, size = 0x200, scoped, tag = 'output window, operand 0, single buffered']
    %14 = vsyncpa [#allocation8], 0
    %15 = vsyncpa [#allocation11], 0
    %16 = vsyncpa [#allocation9], 0
    // Predicated region
    $region2: #{tpu_custom_call.1} parent=1 // pred_check
      _
    $region3: #{tpu_custom_call.1} parent=1 // pred_check_branch
      %18 = sbr.rel (0) target = $region5
    $region4: #{tpu_custom_call.1} parent=1 // pred_region
      %s20 = ssub.s32 64, 64
      %21 = vsyncadd [#allocation8], %s20
      %s23 = sshll.u32 [#allocation7], 4
      %s24 = int_to_ptr.vmem [resolvable:$true] %s23
      %26 = dma.hbm_to_vmem [thread:$0]  %s0, 64, %s24, [#allocation8]
    $region5: #{tpu_custom_call.1} parent=1 // pred_fallthru
      _
    // Predicated region
    $region6: #{tpu_custom_call.1} parent=1 // pred_check
      _
    $region7: #{tpu_custom_call.1} parent=1 // pred_check_branch
      %28 = sbr.rel (0) target = $region9
    $region8: #{tpu_custom_call.1} parent=1 // pred_region
      _
    $region9: #{tpu_custom_call.1} parent=1 // pred_fallthru
      _
    // Predicated region
    $region10: #{tpu_custom_call.1} parent=1 // pred_check
      _
    $region11: #{tpu_custom_call.1} parent=1 // pred_check_branch
      %30 = sbr.rel (0) target = $region13
    $region12: #{tpu_custom_call.1} parent=1 // pred_region
      _
    $region13: #{tpu_custom_call.1} parent=1 // pred_fallthru
      _
    // Predicated region
    $region14: #{tpu_custom_call.1} parent=1 // pred_check
      _
    $region15: #{tpu_custom_call.1} parent=1 // pred_check_branch
      %32 = sbr.rel (0) target = $region17
    $region16: #{tpu_custom_call.1} parent=1 // pred_region
      _
    $region17: #{tpu_custom_call.1} parent=1 // pred_fallthru
      _
    // Predicated region
    $region18: #{tpu_custom_call.1} parent=1 // pred_check
      _
    $region19: #{tpu_custom_call.1} parent=1 // pred_check_branch
      %34 = sbr.rel (0) target = $region21
    $region20: #{tpu_custom_call.1} parent=1 // pred_region
      %s36 = ssub.s32 8192, 8192
      %37 = vsyncadd [#allocation11], %s36
      %s38 = sshll.u32 [#allocation10], 4
      %s39 = int_to_ptr.vmem [resolvable:$true] %s38
      %44 = dma.hbm_to_vmem [thread:$0]  %s4, 8192, %s39, [#allocation11], 64, 64, 4
    $region21: #{tpu_custom_call.1} parent=1 // pred_fallthru
      _
    // Predicated region
    $region22: #{tpu_custom_call.1} parent=1 // pred_check
      _
    $region23: #{tpu_custom_call.1} parent=1 // pred_check_branch
      %46 = sbr.rel (0) target = $region25
    $region24: #{tpu_custom_call.1} parent=1 // pred_region
      _
    $region25: #{tpu_custom_call.1} parent=1 // pred_fallthru
      _
    // Predicated region
    $region26: #{tpu_custom_call.1} parent=1 // pred_check
      _
    $region27: #{tpu_custom_call.1} parent=1 // pred_check_branch
      %48 = sbr.rel (0) target = $region29
    $region28: #{tpu_custom_call.1} parent=1 // pred_region
      _
    $region29: #{tpu_custom_call.1} parent=1 // pred_fallthru
      _
    // Predicated region
    $region30: #{tpu_custom_call.1} parent=1 // pred_check
      _
    $region31: #{tpu_custom_call.1} parent=1 // pred_check_branch
      %50 = sbr.rel (0) target = $region33
    $region32: #{tpu_custom_call.1} parent=1 // pred_region
      _
    $region33: #{tpu_custom_call.1} parent=1 // pred_fallthru
      _
    // Predicated region
    $region34: #{tpu_custom_call.1} parent=1 // pred_check
      _
    $region35: #{tpu_custom_call.1} parent=1 // pred_check_branch
      %52 = sbr.rel (0) target = $region37
    $region36: #{tpu_custom_call.1} parent=1 // pred_region
      %53 = dma.done [#allocation8], 64
    $region37: #{tpu_custom_call.1} parent=1 // pred_fallthru
      _
    // Predicated region
    $region38: #{tpu_custom_call.1} parent=1 // pred_check
      _
    $region39: #{tpu_custom_call.1} parent=1 // pred_check_branch
      %55 = sbr.rel (0) target = $region41
    $region40: #{tpu_custom_call.1} parent=1 // pred_region
      %56 = dma.done [#allocation11], 8192
    $region41: #{tpu_custom_call.1} parent=1 // pred_fallthru
      _
    %p58 = scmp.eq.s32.totalorder 0, 0
    // Predicated region
    $region42: #{tpu_custom_call.1} parent=1 // pred_check
      %p59 = pneg %p58
    $region43: #{tpu_custom_call.1} parent=1 // pred_check_branch
      %61 = sbr.rel (%p59) target = $region45
    $region44: #{tpu_custom_call.1} parent=1 // pred_region
      %v62 = vld [vmem:[#allocation7] sm:$0xf]
      %vm63 = vcmask 60416
      %v64 = vsel %vm63, %v62, -inf
      %65 = vmax.xlane.f32.xlu0 %v64
      %v66 = vpop.xlane.xlu0 %65
      %v67 = vsub.f32 %v62, %v66
      %v68 = vmul.f32 %v67, 1.442695
      %v69 = vpow.pop %v68
      %v70 = vsel %vm63, %v69, 0.0
      %71 = vadd.xlane.f32.xlu0 %v70
      %v72 = vpop.xlane.xlu0 %71
      %v73 = vrcp.pop %v72
      %v74 = vmul.f32 %v69, %v73
      %75 = vst.msk [vmem:[#allocation2] sm:$0xf] %vm63, %v74
      %v76 = vld [vmem:[%s1] sm:$0xf]
      %v77 = vsel %vm63, %v76, -inf
      %78 = vmax.xlane.f32.xlu0 %v77
      %v79 = vpop.xlane.xlu0 %78
      %v80 = vsub.f32 %v76, %v79
      %v81 = vmul.f32 %v80, 1.442695
      %v82 = vpow.pop %v81
      %v83 = vsel %vm63, %v82, 0.0
      %84 = vadd.xlane.f32.xlu0 %v83
      %v85 = vpop.xlane.xlu0 %84
      %v86 = vrcp.pop %v85
      %v87 = vmul.f32 %v82, %v86
      %88 = vst.msk [vmem:[#allocation2 + $0x4] sm:$0xf] %vm63, %v87
      %v89 = vld [vmem:[%s2] sm:$0xf]
      %90 = vst [vmem:[#allocation3] sm:$0xf] %v89
      %v91 = vld [vmem:[%s3] sm:$0xf]
      %92 = vst [vmem:[#allocation3 + $0x4] sm:$0xf] %v91
    $region45: #{tpu_custom_call.1} parent=1 // pred_fallthru
      _
    %v93 = vld [vmem:[#allocation2] sm:$0xff]
    %v94 = vld [vmem:[#allocation3] sm:$0xff]
    %v95 = vlaneseq
    %v96 = vand.u32 %v95, 127
    %s97 = smul.u32 0, 8
    %v98 = vstv %s97
    %vm99 = vcmp.eq.s32.totalorder %v96, %v98
    %v100 = vsel %vm99, %v93, 0.0
    %vm101 = vcmask 64512
    %v102 = vsel %vm101, %v100, 0.0
    %103 = vadd.xlane.f32.xlu0 %v102
    %v104 = vpop.xlane.xlu0 %103
    %v105 = vmul.f32 %v104, %v94
    %v106 = vpack.c.bf16 %v105, %v105
    %107 = vst [vmem:[#allocation4] sm:$0xf] %v106
    %s108 = sadd.s32 %s97, 1
    %v109 = vstv %s108
    %vm110 = vcmp.eq.s32.totalorder %v96, %v109
    %v111 = vsel %vm110, %v93, 0.0
    %v112 = vsel %vm101, %v111, 0.0
    %113 = vadd.xlane.f32.xlu0 %v112
    %v114 = vpop.xlane.xlu0 %113
    %v115 = vmul.f32 %v114, %v94
    %v116 = vpack.c.bf16 %v115, %v115
    %117 = vst [vmem:[#allocation4 + $0x4] sm:$0xf] %v116
    %s118 = sadd.s32 %s97, 2
    %v119 = vstv %s118
    %vm120 = vcmp.eq.s32.totalorder %v96, %v119
    %v121 = vsel %vm120, %v93, 0.0
    %v122 = vsel %vm101, %v121, 0.0
    %123 = vadd.xlane.f32.xlu0 %v122
    %v124 = vpop.xlane.xlu0 %123
    %v125 = vmul.f32 %v124, %v94
    %v126 = vpack.c.bf16 %v125, %v125
    %127 = vst [vmem:[#allocation4 + $0x8] sm:$0xf] %v126
    %s128 = sadd.s32 %s97, 3
    %v129 = vstv %s128
    %vm130 = vcmp.eq.s32.totalorder %v96, %v129
    %v131 = vsel %vm130, %v93, 0.0
    %v132 = vsel %vm101, %v131, 0.0
    %133 = vadd.xlane.f32.xlu0 %v132
    %v134 = vpop.xlane.xlu0 %133
    %v135 = vmul.f32 %v134, %v94
    %v136 = vpack.c.bf16 %v135, %v135
    %137 = vst [vmem:[#allocation4 + $0xc] sm:$0xf] %v136
    %s138 = sadd.s32 %s97, 4
    %v139 = vstv %s138
    %vm140 = vcmp.eq.s32.totalorder %v96, %v139
    %v141 = vsel %vm140, %v93, 0.0
    %v142 = vsel %vm101, %v141, 0.0
    %143 = vadd.xlane.f32.xlu0 %v142
    %v144 = vpop.xlane.xlu0 %143
    %v145 = vmul.f32 %v144, %v94
    %v146 = vpack.c.bf16 %v145, %v145
    %147 = vst [vmem:[#allocation4 + $0x10] sm:$0xf] %v146
    %s148 = sadd.s32 %s97, 5
    %v149 = vstv %s148
    %vm150 = vcmp.eq.s32.totalorder %v96, %v149
    %v151 = vsel %vm150, %v93, 0.0
    %v152 = vsel %vm101, %v151, 0.0
    %153 = vadd.xlane.f32.xlu0 %v152
    %v154 = vpop.xlane.xlu0 %153
    %v155 = vmul.f32 %v154, %v94
    %v156 = vpack.c.bf16 %v155, %v155
    %157 = vst [vmem:[#allocation4 + $0x14] sm:$0xf] %v156
    %s158 = sadd.s32 %s97, 6
    %v159 = vstv %s158
    %vm160 = vcmp.eq.s32.totalorder %v96, %v159
    %v161 = vsel %vm160, %v93, 0.0
    %v162 = vsel %vm101, %v161, 0.0
    %163 = vadd.xlane.f32.xlu0 %v162
    %v164 = vpop.xlane.xlu0 %163
    %v165 = vmul.f32 %v164, %v94
    %v166 = vpack.c.bf16 %v165, %v165
    %167 = vst [vmem:[#allocation4 + $0x18] sm:$0xf] %v166
    %s168 = sadd.s32 %s97, 7
    %v169 = vstv %s168
    %vm170 = vcmp.eq.s32.totalorder %v96, %v169
    %v171 = vsel %vm170, %v93, 0.0
    %v172 = vsel %vm101, %v171, 0.0
    %173 = vadd.xlane.f32.xlu0 %v172
    %v174 = vpop.xlane.xlu0 %173
    %v175 = vmul.f32 %v174, %v94
    %v176 = vpack.c.bf16 %v175, %v175
    %177 = vst [vmem:[#allocation4 + $0x1c] sm:$0xf] %v176
    %v178 = vld [vmem:[#allocation4] sm:$0xff]
    %v179 = vld [vmem:[#allocation4 + $0x8] sm:$0xff]
    %v180 = vld [vmem:[#allocation4 + $0x10] sm:$0xff]
    %v181 = vld [vmem:[#allocation4 + $0x18] sm:$0xff]
    %v182 = vld [vmem:[#allocation10] sm:$0xf]
    %v183 = vld [vmem:[#allocation10 + $0x4] sm:$0xf]
    %v184 = vld [vmem:[#allocation10 + $0x8] sm:$0xf]
    %v185 = vld [vmem:[#allocation10 + $0xc] sm:$0xf]
    %v186 = vld [vmem:[#allocation10 + $0x10] sm:$0xf]
    %v187 = vld [vmem:[#allocation10 + $0x14] sm:$0xf]
    %v188 = vld [vmem:[#allocation10 + $0x18] sm:$0xf]
    %v189 = vld [vmem:[#allocation10 + $0x1c] sm:$0xf]
    %v190 = vld [vmem:[#allocation10 + $0x20] sm:$0xf]
    %v191 = vld [vmem:[#allocation10 + $0x24] sm:$0xf]
    %v192 = vld [vmem:[#allocation10 + $0x28] sm:$0xf]
    %v193 = vld [vmem:[#allocation10 + $0x2c] sm:$0xf]
    %v194 = vld [vmem:[#allocation10 + $0x30] sm:$0xf]
    %v195 = vld [vmem:[#allocation10 + $0x34] sm:$0xf]
    %v196 = vld [vmem:[#allocation10 + $0x38] sm:$0xf]
    %v197 = vld [vmem:[#allocation10 + $0x3c] sm:$0xf]
    %v198 = vld [vmem:[#allocation10 + $0x40] sm:$0xf]
    %v199 = vld [vmem:[#allocation10 + $0x44] sm:$0xf]
    %v200 = vld [vmem:[#allocation10 + $0x48] sm:$0xf]
    %v201 = vld [vmem:[#allocation10 + $0x4c] sm:$0xf]
    %v202 = vld [vmem:[#allocation10 + $0x50] sm:$0xf]
    %v203 = vld [vmem:[#allocation10 + $0x54] sm:$0xf]
    %v204 = vld [vmem:[#allocation10 + $0x58] sm:$0xf]
    %v205 = vld [vmem:[#allocation10 + $0x5c] sm:$0xf]
    %v206 = vld [vmem:[#allocation10 + $0x60] sm:$0xf]
    %v207 = vld [vmem:[#allocation10 + $0x64] sm:$0xf]
    %v208 = vld [vmem:[#allocation10 + $0x68] sm:$0xf]
    %v209 = vld [vmem:[#allocation10 + $0x6c] sm:$0xf]
    %v210 = vld [vmem:[#allocation10 + $0x70] sm:$0xf]
    %v211 = vld [vmem:[#allocation10 + $0x74] sm:$0xf]
    %v212 = vld [vmem:[#allocation10 + $0x78] sm:$0xf]
    %v213 = vld [vmem:[#allocation10 + $0x7c] sm:$0xf]
    %v214 = vld [vmem:[#allocation10 + $0x80] sm:$0xf]
    %v215 = vld [vmem:[#allocation10 + $0x84] sm:$0xf]
    %v216 = vld [vmem:[#allocation10 + $0x88] sm:$0xf]
    %v217 = vld [vmem:[#allocation10 + $0x8c] sm:$0xf]
    %v218 = vld [vmem:[#allocation10 + $0x90] sm:$0xf]
    %v219 = vld [vmem:[#allocation10 + $0x94] sm:$0xf]
    %v220 = vld [vmem:[#allocation10 + $0x98] sm:$0xf]
    %v221 = vld [vmem:[#allocation10 + $0x9c] sm:$0xf]
    %v222 = vld [vmem:[#allocation10 + $0xa0] sm:$0xf]
    %v223 = vld [vmem:[#allocation10 + $0xa4] sm:$0xf]
    %v224 = vld [vmem:[#allocation10 + $0xa8] sm:$0xf]
    %v225 = vld [vmem:[#allocation10 + $0xac] sm:$0xf]
    %v226 = vld [vmem:[#allocation10 + $0xb0] sm:$0xf]
    %v227 = vld [vmem:[#allocation10 + $0xb4] sm:$0xf]
    %v228 = vld [vmem:[#allocation10 + $0xb8] sm:$0xf]
    %v229 = vld [vmem:[#allocation10 + $0xbc] sm:$0xf]
    %v230 = vld [vmem:[#allocation10 + $0xc0] sm:$0xf]
    %v231 = vld [vmem:[#allocation10 + $0xc4] sm:$0xf]
    %v232 = vld [vmem:[#allocation10 + $0xc8] sm:$0xf]
    %v233 = vld [vmem:[#allocation10 + $0xcc] sm:$0xf]
    %v234 = vld [vmem:[#allocation10 + $0xd0] sm:$0xf]
    %v235 = vld [vmem:[#allocation10 + $0xd4] sm:$0xf]
    %v236 = vld [vmem:[#allocation10 + $0xd8] sm:$0xf]
    %v237 = vld [vmem:[#allocation10 + $0xdc] sm:$0xf]
    %v238 = vld [vmem:[#allocation10 + $0xe0] sm:$0xf]
    %v239 = vld [vmem:[#allocation10 + $0xe4] sm:$0xf]
    %v240 = vld [vmem:[#allocation10 + $0xe8] sm:$0xf]
    %v241 = vld [vmem:[#allocation10 + $0xec] sm:$0xf]
    %v242 = vld [vmem:[#allocation10 + $0xf0] sm:$0xf]
    %v243 = vld [vmem:[#allocation10 + $0xf4] sm:$0xf]
    %v244 = vld [vmem:[#allocation10 + $0xf8] sm:$0xf]
    %v245 = vld [vmem:[#allocation10 + $0xfc] sm:$0xf]
    %v246 = vld [vmem:[#allocation10 + $0x100] sm:$0xf]
    %v247 = vld [vmem:[#allocation10 + $0x104] sm:$0xf]
    %v248 = vld [vmem:[#allocation10 + $0x108] sm:$0xf]
    %v249 = vld [vmem:[#allocation10 + $0x10c] sm:$0xf]
    %v250 = vld [vmem:[#allocation10 + $0x110] sm:$0xf]
    %v251 = vld [vmem:[#allocation10 + $0x114] sm:$0xf]
    %v252 = vld [vmem:[#allocation10 + $0x118] sm:$0xf]
    %v253 = vld [vmem:[#allocation10 + $0x11c] sm:$0xf]
    %v254 = vld [vmem:[#allocation10 + $0x120] sm:$0xf]
    %v255 = vld [vmem:[#allocation10 + $0x124] sm:$0xf]
    %v256 = vld [vmem:[#allocation10 + $0x128] sm:$0xf]
    %v257 = vld [vmem:[#allocation10 + $0x12c] sm:$0xf]
    %v258 = vld [vmem:[#allocation10 + $0x130] sm:$0xf]
    %v259 = vld [vmem:[#allocation10 + $0x134] sm:$0xf]
    %v260 = vld [vmem:[#allocation10 + $0x138] sm:$0xf]
    %v261 = vld [vmem:[#allocation10 + $0x13c] sm:$0xf]
    %v262 = vld [vmem:[#allocation10 + $0x140] sm:$0xf]
    %v263 = vld [vmem:[#allocation10 + $0x144] sm:$0xf]
    %v264 = vld [vmem:[#allocation10 + $0x148] sm:$0xf]
    %v265 = vld [vmem:[#allocation10 + $0x14c] sm:$0xf]
    %v266 = vld [vmem:[#allocation10 + $0x150] sm:$0xf]
    %v267 = vld [vmem:[#allocation10 + $0x154] sm:$0xf]
    %v268 = vld [vmem:[#allocation10 + $0x158] sm:$0xf]
    %v269 = vld [vmem:[#allocation10 + $0x15c] sm:$0xf]
    %v270 = vld [vmem:[#allocation10 + $0x160] sm:$0xf]
    %v271 = vld [vmem:[#allocation10 + $0x164] sm:$0xf]
    %v272 = vld [vmem:[#allocation10 + $0x168] sm:$0xf]
    %v273 = vld [vmem:[#allocation10 + $0x16c] sm:$0xf]
    %v274 = vld [vmem:[#allocation10 + $0x170] sm:$0xf]
    %v275 = vld [vmem:[#allocation10 + $0x174] sm:$0xf]
    %v276 = vld [vmem:[#allocation10 + $0x178] sm:$0xf]
    %v277 = vld [vmem:[#allocation10 + $0x17c] sm:$0xf]
    %v278 = vld [vmem:[#allocation10 + $0x180] sm:$0xf]
    %v279 = vld [vmem:[#allocation10 + $0x184] sm:$0xf]
    %v280 = vld [vmem:[#allocation10 + $0x188] sm:$0xf]
    %v281 = vld [vmem:[#allocation10 + $0x18c] sm:$0xf]
    %v282 = vld [vmem:[#allocation10 + $0x190] sm:$0xf]
    %v283 = vld [vmem:[#allocation10 + $0x194] sm:$0xf]
    %v284 = vld [vmem:[#allocation10 + $0x198] sm:$0xf]
    %v285 = vld [vmem:[#allocation10 + $0x19c] sm:$0xf]
    %v286 = vld [vmem:[#allocation10 + $0x1a0] sm:$0xf]
    %v287 = vld [vmem:[#allocation10 + $0x1a4] sm:$0xf]
    %v288 = vld [vmem:[#allocation10 + $0x1a8] sm:$0xf]
    %v289 = vld [vmem:[#allocation10 + $0x1ac] sm:$0xf]
    %v290 = vld [vmem:[#allocation10 + $0x1b0] sm:$0xf]
    %v291 = vld [vmem:[#allocation10 + $0x1b4] sm:$0xf]
    %v292 = vld [vmem:[#allocation10 + $0x1b8] sm:$0xf]
    %v293 = vld [vmem:[#allocation10 + $0x1bc] sm:$0xf]
    %v294 = vld [vmem:[#allocation10 + $0x1c0] sm:$0xf]
    %v295 = vld [vmem:[#allocation10 + $0x1c4] sm:$0xf]
    %v296 = vld [vmem:[#allocation10 + $0x1c8] sm:$0xf]
    %v297 = vld [vmem:[#allocation10 + $0x1cc] sm:$0xf]
    %v298 = vld [vmem:[#allocation10 + $0x1d0] sm:$0xf]
    %v299 = vld [vmem:[#allocation10 + $0x1d4] sm:$0xf]
    %v300 = vld [vmem:[#allocation10 + $0x1d8] sm:$0xf]
    %v301 = vld [vmem:[#allocation10 + $0x1dc] sm:$0xf]
    %v302 = vld [vmem:[#allocation10 + $0x1e0] sm:$0xf]
    %v303 = vld [vmem:[#allocation10 + $0x1e4] sm:$0xf]
    %v304 = vld [vmem:[#allocation10 + $0x1e8] sm:$0xf]
    %v305 = vld [vmem:[#allocation10 + $0x1ec] sm:$0xf]
    %v306 = vld [vmem:[#allocation10 + $0x1f0] sm:$0xf]
    %v307 = vld [vmem:[#allocation10 + $0x1f4] sm:$0xf]
    %v308 = vld [vmem:[#allocation10 + $0x1f8] sm:$0xf]
    %v309 = vld [vmem:[#allocation10 + $0x1fc] sm:$0xf]
    %v314 = vunpack.c.l.b16 %v178
    %v315 = vunpack.c.h.b16 %v178
    %v316 = vunpack.c.l.b16 %v179
    %v317 = vunpack.c.h.b16 %v179
    %v318 = vunpack.c.l.b16 %v180
    %v319 = vunpack.c.h.b16 %v180
    %v320 = vunpack.c.l.b16 %v181
    %v321 = vunpack.c.h.b16 %v181
    %v322 = vpack.c.b16 %v314, %v314
    %v323 = vpack.c.b16 %v315, %v315
    %v324 = vpack.c.b16 %v316, %v316
    %v325 = vpack.c.b16 %v317, %v317
    %v326 = vpack.c.b16 %v318, %v318
    %v327 = vpack.c.b16 %v319, %v319
    %v328 = vpack.c.b16 %v320, %v320
    %v329 = vpack.c.b16 %v321, %v321
    %v466 = vunpack.c.l.b16 %v182
    %v467 = vunpack.c.l.b16 %v183
    %v468 = vunpack.c.l.b16 %v184
    %v469 = vunpack.c.l.b16 %v185
    %v470 = vunpack.c.l.b16 %v186
    %v471 = vunpack.c.l.b16 %v187
    %v472 = vunpack.c.l.b16 %v188
    %v473 = vunpack.c.l.b16 %v189
    %v474 = vunpack.c.l.b16 %v190
    %v475 = vunpack.c.l.b16 %v191
    %v476 = vunpack.c.l.b16 %v192
    %v477 = vunpack.c.l.b16 %v193
    %v478 = vunpack.c.l.b16 %v194
    %v479 = vunpack.c.l.b16 %v195
    %v480 = vunpack.c.l.b16 %v196
    %v481 = vunpack.c.l.b16 %v197
    %v482 = vunpack.c.l.b16 %v198
    %v483 = vunpack.c.l.b16 %v199
    %v484 = vunpack.c.l.b16 %v200
    %v485 = vunpack.c.l.b16 %v201
    %v486 = vunpack.c.l.b16 %v202
    %v487 = vunpack.c.l.b16 %v203
    %v488 = vunpack.c.l.b16 %v204
    %v489 = vunpack.c.l.b16 %v205
    %v490 = vunpack.c.l.b16 %v206
    %v491 = vunpack.c.l.b16 %v207
    %v492 = vunpack.c.l.b16 %v208
    %v493 = vunpack.c.l.b16 %v209
    %v494 = vunpack.c.l.b16 %v210
    %v495 = vunpack.c.l.b16 %v211
    %v496 = vunpack.c.l.b16 %v212
    %v497 = vunpack.c.l.b16 %v213
    %v498 = vunpack.c.l.b16 %v214
    %v499 = vunpack.c.l.b16 %v215
    %v500 = vunpack.c.l.b16 %v216
    %v501 = vunpack.c.l.b16 %v217
    %v502 = vunpack.c.l.b16 %v218
    %v503 = vunpack.c.l.b16 %v219
    %v504 = vunpack.c.l.b16 %v220
    %v505 = vunpack.c.l.b16 %v221
    %v506 = vunpack.c.l.b16 %v222
    %v507 = vunpack.c.l.b16 %v223
    %v508 = vunpack.c.l.b16 %v224
    %v509 = vunpack.c.l.b16 %v225
    %v510 = vunpack.c.l.b16 %v226
    %v511 = vunpack.c.l.b16 %v227
    %v512 = vunpack.c.l.b16 %v228
    %v513 = vunpack.c.l.b16 %v229
    %v514 = vunpack.c.l.b16 %v230
    %v515 = vunpack.c.l.b16 %v231
    %v516 = vunpack.c.l.b16 %v232
    %v517 = vunpack.c.l.b16 %v233
    %v518 = vunpack.c.l.b16 %v234
    %v519 = vunpack.c.l.b16 %v235
    %v520 = vunpack.c.l.b16 %v236
    %v521 = vunpack.c.l.b16 %v237
    %v522 = vunpack.c.l.b16 %v238
    %v523 = vunpack.c.l.b16 %v239
    %v524 = vunpack.c.l.b16 %v240
    %v525 = vunpack.c.l.b16 %v241
    %v526 = vunpack.c.l.b16 %v242
    %v527 = vunpack.c.l.b16 %v243
    %v528 = vunpack.c.l.b16 %v244
    %v529 = vunpack.c.l.b16 %v245
    %v530 = vunpack.c.l.b16 %v246
    %v531 = vunpack.c.l.b16 %v247
    %v532 = vunpack.c.l.b16 %v248
    %v533 = vunpack.c.l.b16 %v249
    %v534 = vunpack.c.l.b16 %v250
    %v535 = vunpack.c.l.b16 %v251
    %v536 = vunpack.c.l.b16 %v252
    %v537 = vunpack.c.l.b16 %v253
    %v538 = vunpack.c.l.b16 %v254
    %v539 = vunpack.c.l.b16 %v255
    %v540 = vunpack.c.l.b16 %v256
    %v541 = vunpack.c.l.b16 %v257
    %v542 = vunpack.c.l.b16 %v258
    %v543 = vunpack.c.l.b16 %v259
    %v544 = vunpack.c.l.b16 %v260
    %v545 = vunpack.c.l.b16 %v261
    %v546 = vunpack.c.l.b16 %v262
    %v547 = vunpack.c.l.b16 %v263
    %v548 = vunpack.c.l.b16 %v264
    %v549 = vunpack.c.l.b16 %v265
    %v550 = vunpack.c.l.b16 %v266
    %v551 = vunpack.c.l.b16 %v267
    %v552 = vunpack.c.l.b16 %v268
    %v553 = vunpack.c.l.b16 %v269
    %v554 = vunpack.c.l.b16 %v270
    %v555 = vunpack.c.l.b16 %v271
    %v556 = vunpack.c.l.b16 %v272
    %v557 = vunpack.c.l.b16 %v273
    %v558 = vunpack.c.l.b16 %v274
    %v559 = vunpack.c.l.b16 %v275
    %v560 = vunpack.c.l.b16 %v276
    %v561 = vunpack.c.l.b16 %v277
    %v562 = vunpack.c.l.b16 %v278
    %v563 = vunpack.c.l.b16 %v279
    %v564 = vunpack.c.l.b16 %v280
    %v565 = vunpack.c.l.b16 %v281
    %v566 = vunpack.c.l.b16 %v282
    %v567 = vunpack.c.l.b16 %v283
    %v568 = vunpack.c.l.b16 %v284
    %v569 = vunpack.c.l.b16 %v285
    %v570 = vunpack.c.l.b16 %v286
    %v571 = vunpack.c.l.b16 %v287
    %v572 = vunpack.c.l.b16 %v288
    %v573 = vunpack.c.l.b16 %v289
    %v574 = vunpack.c.l.b16 %v290
    %v575 = vunpack.c.l.b16 %v291
    %v576 = vunpack.c.l.b16 %v292
    %v577 = vunpack.c.l.b16 %v293
    %v578 = vunpack.c.l.b16 %v294
    %v579 = vunpack.c.l.b16 %v295
    %v580 = vunpack.c.l.b16 %v296
    %v581 = vunpack.c.l.b16 %v297
    %v582 = vunpack.c.l.b16 %v298
    %v583 = vunpack.c.l.b16 %v299
    %v584 = vunpack.c.l.b16 %v300
    %v585 = vunpack.c.l.b16 %v301
    %v586 = vunpack.c.l.b16 %v302
    %v587 = vunpack.c.l.b16 %v303
    %v588 = vunpack.c.l.b16 %v304
    %v589 = vunpack.c.l.b16 %v305
    %v590 = vunpack.c.l.b16 %v306
    %v591 = vunpack.c.l.b16 %v307
    %v592 = vunpack.c.l.b16 %v308
    %v593 = vunpack.c.l.b16 %v309
    %v594 = vpack.c.b16 %v467, %v466
    %v595 = vpack.c.b16 %v469, %v468
    %v596 = vpack.c.b16 %v471, %v470
    %v597 = vpack.c.b16 %v473, %v472
    %v598 = vpack.c.b16 %v475, %v474
    %v599 = vpack.c.b16 %v477, %v476
    %v600 = vpack.c.b16 %v479, %v478
    %v601 = vpack.c.b16 %v481, %v480
    %v602 = vpack.c.b16 %v483, %v482
    %v603 = vpack.c.b16 %v485, %v484
    %v604 = vpack.c.b16 %v487, %v486
    %v605 = vpack.c.b16 %v489, %v488
    %v606 = vpack.c.b16 %v491, %v490
    %v607 = vpack.c.b16 %v493, %v492
    %v608 = vpack.c.b16 %v495, %v494
    %v609 = vpack.c.b16 %v497, %v496
    %v610 = vpack.c.b16 %v499, %v498
    %v611 = vpack.c.b16 %v501, %v500
    %v612 = vpack.c.b16 %v503, %v502
    %v613 = vpack.c.b16 %v505, %v504
    %v614 = vpack.c.b16 %v507, %v506
    %v615 = vpack.c.b16 %v509, %v508
    %v616 = vpack.c.b16 %v511, %v510
    %v617 = vpack.c.b16 %v513, %v512
    %v618 = vpack.c.b16 %v515, %v514
    %v619 = vpack.c.b16 %v517, %v516
    %v620 = vpack.c.b16 %v519, %v518
    %v621 = vpack.c.b16 %v521, %v520
    %v622 = vpack.c.b16 %v523, %v522
    %v623 = vpack.c.b16 %v525, %v524
    %v624 = vpack.c.b16 %v527, %v526
    %v625 = vpack.c.b16 %v529, %v528
    %v626 = vpack.c.b16 %v531, %v530
    %v627 = vpack.c.b16 %v533, %v532
    %v628 = vpack.c.b16 %v535, %v534
    %v629 = vpack.c.b16 %v537, %v536
    %v630 = vpack.c.b16 %v539, %v538
    %v631 = vpack.c.b16 %v541, %v540
    %v632 = vpack.c.b16 %v543, %v542
    %v633 = vpack.c.b16 %v545, %v544
    %v634 = vpack.c.b16 %v547, %v546
    %v635 = vpack.c.b16 %v549, %v548
    %v636 = vpack.c.b16 %v551, %v550
    %v637 = vpack.c.b16 %v553, %v552
    %v638 = vpack.c.b16 %v555, %v554
    %v639 = vpack.c.b16 %v557, %v556
    %v640 = vpack.c.b16 %v559, %v558
    %v641 = vpack.c.b16 %v561, %v560
    %v642 = vpack.c.b16 %v563, %v562
    %v643 = vpack.c.b16 %v565, %v564
    %v644 = vpack.c.b16 %v567, %v566
    %v645 = vpack.c.b16 %v569, %v568
    %v646 = vpack.c.b16 %v571, %v570
    %v647 = vpack.c.b16 %v573, %v572
    %v648 = vpack.c.b16 %v575, %v574
    %v649 = vpack.c.b16 %v577, %v576
    %v650 = vpack.c.b16 %v579, %v578
    %v651 = vpack.c.b16 %v581, %v580
    %v652 = vpack.c.b16 %v583, %v582
    %v653 = vpack.c.b16 %v585, %v584
    %v654 = vpack.c.b16 %v587, %v586
    %v655 = vpack.c.b16 %v589, %v588
    %v656 = vpack.c.b16 %v591, %v590
    %v657 = vpack.c.b16 %v593, %v592
    %722 = vmatprep.subr.bf16.mxu0 0
    %723 = vmatpush1.bf16.msra.mxu0 %v594
    %724 = vmatprep.subr.bf16.mxu0 0
    %725 = vmatpush1.bf16.msra.mxu0 %v595
    %726 = vmatprep.subr.bf16.mxu0 0
    %727 = vmatpush1.bf16.msra.mxu0 %v596
    %728 = vmatprep.subr.bf16.mxu0 0
    %729 = vmatpush1.bf16.msra.mxu0 %v597
    %730 = vmatprep.subr.bf16.mxu0 0
    %731 = vmatpush1.bf16.msra.mxu0 %v598
    %732 = vmatprep.subr.bf16.mxu0 0
    %733 = vmatpush1.bf16.msra.mxu0 %v599
    %734 = vmatprep.subr.bf16.mxu0 0
    %735 = vmatpush1.bf16.msra.mxu0 %v600
    %736 = vmatprep.subr.bf16.mxu0 0
    %737 = vmatpush1.bf16.msra.mxu0 %v601
    %738 = vmatprep.subr.bf16.mxu0 0
    %739 = vmatpush1.bf16.msra.mxu0 %v602
    %740 = vmatprep.subr.bf16.mxu0 0
    %741 = vmatpush1.bf16.msra.mxu0 %v603
    %742 = vmatprep.subr.bf16.mxu0 0
    %743 = vmatpush1.bf16.msra.mxu0 %v604
    %744 = vmatprep.subr.bf16.mxu0 0
    %745 = vmatpush1.bf16.msra.mxu0 %v605
    %746 = vmatprep.subr.bf16.mxu0 0
    %747 = vmatpush1.bf16.msra.mxu0 %v606
    %748 = vmatprep.subr.bf16.mxu0 0
    %749 = vmatpush1.bf16.msra.mxu0 %v607
    %750 = vmatprep.subr.bf16.mxu0 0
    %751 = vmatpush1.bf16.msra.mxu0 %v608
    %752 = vmatprep.subr.bf16.mxu0 0
    %753 = vmatpush1.bf16.msra.mxu0 %v609
    %754 = vmatprep.mubr.bf16.mxu0 %v323
    %755 = vmatmul.mubr.bf16.gmra.mrb[0].mxu0 %v322
    %v756 = vpop.f32.mrb[0].mxu0
    %v757 = vadd.f32 0.0, %v756
    %v758 = vpop.f32.mrb[0].mxu0
    %v759 = vpop.f32.mrb[0].mxu0
    %v760 = vpop.f32.mrb[0].mxu0
    %761 = vdwg.mxu0
    %762 = vmatprep.subr.bf16.mxu0 0
    %763 = vmatpush1.bf16.msra.mxu0 %v610
    %764 = vmatprep.subr.bf16.mxu0 0
    %765 = vmatpush1.bf16.msra.mxu0 %v611
    %766 = vmatprep.subr.bf16.mxu0 0
    %767 = vmatpush1.bf16.msra.mxu0 %v612
    %768 = vmatprep.subr.bf16.mxu0 0
    %769 = vmatpush1.bf16.msra.mxu0 %v613
    %770 = vmatprep.subr.bf16.mxu0 0
    %771 = vmatpush1.bf16.msra.mxu0 %v614
    %772 = vmatprep.subr.bf16.mxu0 0
    %773 = vmatpush1.bf16.msra.mxu0 %v615
    %774 = vmatprep.subr.bf16.mxu0 0
    %775 = vmatpush1.bf16.msra.mxu0 %v616
    %776 = vmatprep.subr.bf16.mxu0 0
    %777 = vmatpush1.bf16.msra.mxu0 %v617
    %778 = vmatprep.subr.bf16.mxu0 0
    %779 = vmatpush1.bf16.msra.mxu0 %v618
    %780 = vmatprep.subr.bf16.mxu0 0
    %781 = vmatpush1.bf16.msra.mxu0 %v619
    %782 = vmatprep.subr.bf16.mxu0 0
    %783 = vmatpush1.bf16.msra.mxu0 %v620
    %784 = vmatprep.subr.bf16.mxu0 0
    %785 = vmatpush1.bf16.msra.mxu0 %v621
    %786 = vmatprep.subr.bf16.mxu0 0
    %787 = vmatpush1.bf16.msra.mxu0 %v622
    %788 = vmatprep.subr.bf16.mxu0 0
    %789 = vmatpush1.bf16.msra.mxu0 %v623
    %790 = vmatprep.subr.bf16.mxu0 0
    %791 = vmatpush1.bf16.msra.mxu0 %v624
    %792 = vmatprep.subr.bf16.mxu0 0
    %793 = vmatpush1.bf16.msra.mxu0 %v625
    %794 = vmatprep.mubr.bf16.mxu0 %v325
    %795 = vmatmul.mubr.bf16.gmra.mrb[0].mxu0 %v324
    %v796 = vpop.f32.mrb[0].mxu0
    %v797 = vadd.f32 %v757, %v796
    %v798 = vpop.f32.mrb[0].mxu0
    %v799 = vpop.f32.mrb[0].mxu0
    %v800 = vpop.f32.mrb[0].mxu0
    %801 = vdwg.mxu0
    %802 = vmatprep.subr.bf16.mxu0 0
    %803 = vmatpush1.bf16.msra.mxu0 %v626
    %804 = vmatprep.subr.bf16.mxu0 0
    %805 = vmatpush1.bf16.msra.mxu0 %v627
    %806 = vmatprep.subr.bf16.mxu0 0
    %807 = vmatpush1.bf16.msra.mxu0 %v628
    %808 = vmatprep.subr.bf16.mxu0 0
    %809 = vmatpush1.bf16.msra.mxu0 %v629
    %810 = vmatprep.subr.bf16.mxu0 0
    %811 = vmatpush1.bf16.msra.mxu0 %v630
    %812 = vmatprep.subr.bf16.mxu0 0
    %813 = vmatpush1.bf16.msra.mxu0 %v631
    %814 = vmatprep.subr.bf16.mxu0 0
    %815 = vmatpush1.bf16.msra.mxu0 %v632
    %816 = vmatprep.subr.bf16.mxu0 0
    %817 = vmatpush1.bf16.msra.mxu0 %v633
    %818 = vmatprep.subr.bf16.mxu0 0
    %819 = vmatpush1.bf16.msra.mxu0 %v634
    %820 = vmatprep.subr.bf16.mxu0 0
    %821 = vmatpush1.bf16.msra.mxu0 %v635
    %822 = vmatprep.subr.bf16.mxu0 0
    %823 = vmatpush1.bf16.msra.mxu0 %v636
    %824 = vmatprep.subr.bf16.mxu0 0
    %825 = vmatpush1.bf16.msra.mxu0 %v637
    %826 = vmatprep.subr.bf16.mxu0 0
    %827 = vmatpush1.bf16.msra.mxu0 %v638
    %828 = vmatprep.subr.bf16.mxu0 0
    %829 = vmatpush1.bf16.msra.mxu0 %v639
    %830 = vmatprep.subr.bf16.mxu0 0
    %831 = vmatpush1.bf16.msra.mxu0 %v640
    %832 = vmatprep.subr.bf16.mxu0 0
    %833 = vmatpush1.bf16.msra.mxu0 %v641
    %834 = vmatprep.mubr.bf16.mxu0 %v327
    %835 = vmatmul.mubr.bf16.gmra.mrb[0].mxu0 %v326
    %v836 = vpop.f32.mrb[0].mxu0
    %v837 = vadd.f32 %v797, %v836
    %v838 = vpop.f32.mrb[0].mxu0
    %v839 = vpop.f32.mrb[0].mxu0
    %v840 = vpop.f32.mrb[0].mxu0
    %841 = vdwg.mxu0
    %842 = vmatprep.subr.bf16.mxu0 0
    %843 = vmatpush1.bf16.msra.mxu0 %v642
    %844 = vmatprep.subr.bf16.mxu0 0
    %845 = vmatpush1.bf16.msra.mxu0 %v643
    %846 = vmatprep.subr.bf16.mxu0 0
    %847 = vmatpush1.bf16.msra.mxu0 %v644
    %848 = vmatprep.subr.bf16.mxu0 0
    %849 = vmatpush1.bf16.msra.mxu0 %v645
    %850 = vmatprep.subr.bf16.mxu0 0
    %851 = vmatpush1.bf16.msra.mxu0 %v646
    %852 = vmatprep.subr.bf16.mxu0 0
    %853 = vmatpush1.bf16.msra.mxu0 %v647
    %854 = vmatprep.subr.bf16.mxu0 0
    %855 = vmatpush1.bf16.msra.mxu0 %v648
    %856 = vmatprep.subr.bf16.mxu0 0
    %857 = vmatpush1.bf16.msra.mxu0 %v649
    %858 = vmatprep.subr.bf16.mxu0 0
    %859 = vmatpush1.bf16.msra.mxu0 %v650
    %860 = vmatprep.subr.bf16.mxu0 0
    %861 = vmatpush1.bf16.msra.mxu0 %v651
    %862 = vmatprep.subr.bf16.mxu0 0
    %863 = vmatpush1.bf16.msra.mxu0 %v652
    %864 = vmatprep.subr.bf16.mxu0 0
    %865 = vmatpush1.bf16.msra.mxu0 %v653
    %866 = vmatprep.subr.bf16.mxu0 0
    %867 = vmatpush1.bf16.msra.mxu0 %v654
    %868 = vmatprep.subr.bf16.mxu0 0
    %869 = vmatpush1.bf16.msra.mxu0 %v655
    %870 = vmatprep.subr.bf16.mxu0 0
    %871 = vmatpush1.bf16.msra.mxu0 %v656
    %872 = vmatprep.subr.bf16.mxu0 0
    %873 = vmatpush1.bf16.msra.mxu0 %v657
    %874 = vmatprep.mubr.bf16.mxu0 %v329
    %875 = vmatmul.mubr.bf16.gmra.mrb[0].mxu0 %v328
    %v876 = vpop.f32.mrb[0].mxu0
    %v877 = vadd.f32 %v837, %v876
    %v878 = vpop.f32.mrb[0].mxu0
    %v879 = vpop.f32.mrb[0].mxu0
    %v880 = vpop.f32.mrb[0].mxu0
    %881 = vdwg.mxu0
    // Predicated region
    $region46: #{tpu_custom_call.1} parent=1 // pred_check
      %p882 = pneg %p58
    $region47: #{tpu_custom_call.1} parent=1 // pred_check_branch
      %884 = sbr.rel (%p882) target = $region49
    $region48: #{tpu_custom_call.1} parent=1 // pred_region
      %885 = vst [vmem:[#allocation5] sm:$0xff] %v877
    $region49: #{tpu_custom_call.1} parent=1 // pred_fallthru
      _
    %p886 = scmp.gt.s32.totalorder 0, 0
    // Predicated region
    $region50: #{tpu_custom_call.1} parent=1 // pred_check
      %p887 = pneg %p886
    $region51: #{tpu_custom_call.1} parent=1 // pred_check_branch
      %889 = sbr.rel (%p887) target = $region53
    $region52: #{tpu_custom_call.1} parent=1 // pred_region
      %v890 = vld [vmem:[#allocation5] sm:$0xff]
      %v891 = vadd.f32 %v890, %v877
      %892 = vst [vmem:[#allocation5] sm:$0xff] %v891
    $region53: #{tpu_custom_call.1} parent=1 // pred_fallthru
      _
    // Predicated region
    $region54: #{tpu_custom_call.1} parent=1 // pred_check
      %p893 = pneg %p58
    $region55: #{tpu_custom_call.1} parent=1 // pred_check_branch
      %895 = sbr.rel (%p893) target = $region57
    $region56: #{tpu_custom_call.1} parent=1 // pred_region
      %v896 = vld [vmem:[%s5] sm:$0x1]
      %v897 = vld [vmem:[%s6] sm:$0x1]
      %s898 = sld [smem:[#allocation6]]
      %v899 = vld [vmem:[#allocation5] sm:$0xff]
      %v901 = vlaneseq
      %v902 = vshrl.u32 %v901, 7
      %v903 = vsub.s32 0, %v902
      %v904 = vrot.slane %v896, %v903
      %v906 = vadd.f32 %v899, %v904
      %v907 = vmax.f32 %v906, 0.0
      %v909 = vlaneseq
      %v910 = vshrl.u32 %v909, 7
      %v911 = vsub.s32 0, %v910
      %v912 = vrot.slane %v897, %v911
      %v914 = vmul.f32 %v907, %v912
      %915 = vadd.xlane.f32.xlu0 %v914
      %v916 = vpop.xlane.xlu0 %915
      %v917 = vstv %s898
      %v918 = vadd.f32 %v916, %v917
      %v919 = vmax.f32 %v918, 0.0
      %v920 = vand.u32 2147483647, %v918
      %v921 = vsub.f32 0.0, %v920
      %v922 = vmul.f32 %v921, 1.442695
      %v923 = vpow.pop %v922
      %v924 = vadd.f32 %v923, 1.0
      %v925 = vlog2.pop %v924
      %v926 = vmul.f32 %v925, 0.6931472
      %v927 = vmul.f32 -0.5, %v923
      %v928 = vadd.f32 %v927, 1.0
      %v929 = vmul.f32 %v928, %v923
      %v930 = vand.u32 2147483647, %v923
      %vm931 = vcmp.lt.f32.partialorder %v930, 0.0004427343
      %v932 = vsel %vm931, %v929, %v926
      %v933 = vadd.f32 %v919, %v932
      %v934 = vsub.f32 %v933, %v918
      %vm935 = vcmask 3072
      %v936 = vsel %vm935, %v934, 0.0
      %937 = vadd.xlane.f32.xlu0 %v936
      %v938 = vpop.xlane.xlu0 %937
      %v939 = vrot.slane %v938, 4
      %v940 = vadd.f32 %v938, %v939
      %v941 = vrot.slane %v940, 2
      %v942 = vadd.f32 %v940, %v941
      %v943 = vrot.slane %v942, 1
      %v944 = vadd.f32 %v942, %v943
      %s945 = vtos %v944
      %v947 = vrot.slane %v933, 4
      %v949 = vsel %vm935, %v947, 0.0
      %950 = vadd.xlane.f32.xlu0 %v949
      %v951 = vpop.xlane.xlu0 %950
      %v952 = vrot.slane %v951, 4
      %v953 = vadd.f32 %v951, %v952
      %v954 = vrot.slane %v953, 2
      %v955 = vadd.f32 %v953, %v954
      %v956 = vrot.slane %v955, 1
      %v957 = vadd.f32 %v955, %v956
      %s958 = vtos %v957
      %s959 = sadd.f32 %s945, %s958
      %v960 = vrcp.pop 8.0
      %s961 = vtos %v960
      %s962 = smul.f32 %s959, %s961
      %s963 = scalar_lea.smem [#allocation12], 0
      %964 = sst [smem:[%s963]] %s962
    $region57: #{tpu_custom_call.1} parent=1 // pred_fallthru
      _
    // Predicated region
    $region58: #{tpu_custom_call.1} parent=1 // pred_check
      _
    $region59: #{tpu_custom_call.1} parent=1 // pred_check_branch
      %966 = sbr.rel (0) target = $region61
    $region60: #{tpu_custom_call.1} parent=1 // pred_region
      %s968 = ssub.s32 16, 16
      %969 = vsyncadd [#allocation9], %s968
      %972 = dma.smem_to_hbm [#allocation12], 16, %s8, [#allocation9]
    $region61: #{tpu_custom_call.1} parent=1 // pred_fallthru
      _
    // Predicated region
    $region62: #{tpu_custom_call.1} parent=1 // pred_check
      _
    $region63: #{tpu_custom_call.1} parent=1 // pred_check_branch
      %974 = sbr.rel (0) target = $region65
    $region64: #{tpu_custom_call.1} parent=1 // pred_region
      %975 = dma.done [#allocation9], 16
    $region65: #{tpu_custom_call.1} parent=1 // pred_fallthru
      _
    %976 = sfence
    %977 = vsyncpa [#allocation8], 1
    %978 = vsyncpa [#allocation11], 1
    %979 = vsyncpa [#allocation9], 1

</llo_original>
